<compile_context>
chip_gen: v5e
topology: v5e:2x2
jax: 0.10.0
libtpu: 0.0.40
codegen_flags: <defaults>
</compile_context>

<pallas_src>
import functools

import jax
import jax.numpy as jnp
from jax.experimental import pallas as pl
from jax.experimental.pallas import tpu as pltpu

_BN_EPS = 1e-5


def mlp_block_kernel(x_ref, w_ref, gb_ref, o_ref, *, mm_dtype):
    # Cast to the MXU dtype in-kernel (no extra HBM copies in the wrapper); accumulate f32.
    h = jnp.dot(
        x_ref[...].astype(mm_dtype),
        w_ref[...].astype(mm_dtype),
        preferred_element_type=jnp.float32,
    )

    # BatchNorm1d training-mode (biased) batch statistics.  Two-pass variance for
    # numerical robustness (h is already resident in VMEM, the second pass is cheap).
    n = h.shape[0]
    inv_n = 1.0 / n
    mean = jnp.sum(h, axis=0, keepdims=True) * inv_n
    centered = h - mean
    var = jnp.sum(centered * centered, axis=0, keepdims=True) * inv_n
    inv_std = jax.lax.rsqrt(var + _BN_EPS)

    # Fused BN affine on the centered values (Linear bias already cancelled by the mean).
    gamma = gb_ref[0:1, :]
    beta = gb_ref[1:2, :]
    y = centered * (gamma * inv_std) + beta

    # ReLU; Dropout(0) is the identity.
    o_ref[...] = jnp.maximum(y, 0.0).astype(o_ref.dtype)


def _vmem_capacity_bytes():
    """Per-generation VMEM capacity (v5e/v6e: 128 MiB, v7x: 64 MiB per TC)."""
    try:
        return int(pltpu.get_tpu_info().vmem_capacity_bytes)
    except Exception:
        return 64 * 1024 * 1024  # conservative fallback == v7x per-TC VMEM


def _estimate_vmem(n, d_in, tn, x_itemsize, w_itemsize, out_itemsize):
    x_bytes = n * d_in * x_itemsize          # resident x (constant index_map)
    w_bytes = 2 * d_in * tn * w_itemsize     # double-buffered weight tiles
    gb_bytes = 2 * 2 * tn * 4                # double-buffered packed gamma/beta
    out_bytes = 2 * n * tn * out_itemsize    # double-buffered output tiles
    scratch = n * tn * 4 + n * (d_in + tn) * 2  # f32 h + in-kernel bf16 casts
    return x_bytes + w_bytes + gb_bytes + out_bytes + scratch


def _choose_tn(d_out, tn_req, tn_max):
    """Lane-dense tile (multiple of 128), preferring a divisor of d_out (no padding/slice)."""
    tn_req = max(128, min(tn_req, tn_max))
    tn_req = (tn_req // 128) * 128
    if d_out % 128 == 0:
        for cand in range(min(tn_req, d_out), 127, -128):
            if d_out % cand == 0:
                return cand
    return min(tn_req, pl.cdiv(d_out, 128) * 128)


def mlp_block(x, w, b, gamma, beta, *, tn=512, mm_dtype=jnp.bfloat16,
              out_dtype=jnp.float32):
    """Forward pass of MLPBlock (training-mode BatchNorm).

    x:     [N, D_in]
    w:     [D_in, D_out]  (nn.Linear weight, pre-transposed)
    b:     [1, D_out]     (unused: exactly cancelled by BN's batch-mean subtraction)
    gamma: [1, D_out]     BatchNorm weight
    beta:  [1, D_out]     BatchNorm bias
    """
    del b  # cancelled exactly by training-mode BN mean subtraction

    N, D_in = x.shape
    D_out = w.shape[1]

    out_itemsize = jnp.dtype(out_dtype).itemsize
    x_itemsize = jnp.dtype(x.dtype).itemsize
    w_itemsize = jnp.dtype(w.dtype).itemsize

    # Per-generation VMEM budget; clamp tn to fit (re-derived automatically for v7x's 64 MiB).
    vmem_cap = _vmem_capacity_bytes()
    vmem_limit = int(0.8 * vmem_cap)
    tn_fit = max(128, (min(tn, pl.cdiv(D_out, 128) * 128) // 128) * 128)
    while tn_fit > 128 and _estimate_vmem(N, D_in, tn_fit, x_itemsize, w_itemsize,
                                          out_itemsize) > vmem_limit:
        tn_fit -= 128
    if _estimate_vmem(N, D_in, tn_fit, x_itemsize, w_itemsize, out_itemsize) > vmem_limit:
        # TODO(synk): implement the two-phase (sum/sumsq) N-tiled BN-stats path for batches
        # that do not fit in VMEM (needed 2x sooner on v7x's 64 MiB per-TC VMEM).
        raise NotImplementedError(
            "MLPBlock kernel: batch does not fit in VMEM; N-tiled BN path not implemented")

    tn = _choose_tn(D_out, tn, tn_fit)
    d_pad = pl.cdiv(D_out, tn) * tn
    if d_pad != D_out:
        w = jnp.pad(w, ((0, 0), (0, d_pad - D_out)))
        gamma = jnp.pad(gamma, ((0, 0), (0, d_pad - D_out)))
        beta = jnp.pad(beta, ((0, 0), (0, d_pad - D_out)))

    # Pack gamma/beta into one [2, d_pad] array -> single small per-step DMA.
    gb = jnp.concatenate([gamma.astype(jnp.float32), beta.astype(jnp.float32)], axis=0)

    grid = (d_pad // tn,)

    bytes_accessed = (
        x.size * x_itemsize
        + D_in * d_pad * w_itemsize
        + gb.size * 4
        + N * d_pad * out_itemsize
    )
    cost = pl.CostEstimate(
        flops=2 * N * D_in * d_pad + 8 * N * d_pad,
        transcendentals=d_pad,  # one rsqrt per feature
        bytes_accessed=bytes_accessed,
    )

    kernel = functools.partial(mlp_block_kernel, mm_dtype=mm_dtype)

    out = pl.pallas_call(
        kernel,
        out_shape=jax.ShapeDtypeStruct((N, d_pad), out_dtype),
        grid=grid,
        in_specs=[
            # x: constant index_map -> compiler keeps the invariant block resident
            # (no re-fetch across feature tiles).
            pl.BlockSpec((N, D_in), lambda j: (0, 0)),
            # weight tile: pipelined (double-buffered) across the feature grid.
            pl.BlockSpec((D_in, tn), lambda j: (0, j)),
            # packed gamma/beta tile.
            pl.BlockSpec((2, tn), lambda j: (0, j)),
        ],
        out_specs=pl.BlockSpec((N, tn), lambda j: (0, j)),
        compiler_params=pltpu.CompilerParams(
            # Feature tiles are fully independent (BN reduces over batch only), so this
            # axis shards across v7x's two TensorCores; no effect on single-TC v5e/v6e.
            dimension_semantics=("parallel",),
            vmem_limit_bytes=vmem_limit,
        ),
        cost_estimate=cost,
    )(x, w, gb)

    if d_pad != D_out:
        out = out[:, :D_out]
    return out


def reference(x, w, b, gamma, beta):
    # Pure-f32 reference matching the PyTorch module in training mode.
    h = x @ w + b
    mean = h.mean(axis=0, keepdims=True)
    var = ((h - mean) ** 2).mean(axis=0, keepdims=True)
    y = gamma * (h - mean) / jnp.sqrt(var + _BN_EPS) + beta
    return jnp.maximum(y, 0.0)


if __name__ == "__main__":
    key = jax.random.PRNGKey(0)

    # Small shapes: first case has D_out a multiple of 128 (no padding / no trailing slice),
    # second exercises the padded-D_out path.
    test_cases = [(16, 32, 256), (16, 32, 200)]

    for (N, D_in, D_out) in test_cases:
        k_x, k_w, k_b, k_g, k_be, key = jax.random.split(key, 6)

        x = jax.random.normal(k_x, (N, D_in), dtype=jnp.float32)

        # nn.Linear(D_in, D_out) init; weight stored transposed as [D_in, D_out].
        bound = 1.0 / (D_in ** 0.5)
        w = jax.random.uniform(k_w, (D_in, D_out), minval=-bound, maxval=bound,
                               dtype=jnp.float32)
        b = jax.random.uniform(k_b, (1, D_out), minval=-bound, maxval=bound,
                               dtype=jnp.float32)
        gamma = jax.random.uniform(k_g, (1, D_out), minval=0.5, maxval=1.5,
                                   dtype=jnp.float32)
        beta = jax.random.uniform(k_be, (1, D_out), minval=-0.5, maxval=0.5,
                                  dtype=jnp.float32)

        out = jax.block_until_ready(mlp_block(x, w, b, gamma, beta))
        ref = reference(x, w, b, gamma, beta)

        assert out.shape == (N, D_out), f"bad shape {out.shape}"
        # bf16 MXU operands (f32 accumulate) vs pure-f32 reference -> modest tolerance.
        assert jnp.allclose(out, ref, atol=2e-2, rtol=2e-2), \
            f"mismatch vs reference for case N={N}, D_in={D_in}, D_out={D_out}"

    print("KERNEL_OK")
</pallas_src>

<mosaic_0001>
module attributes {stable_mosaic.version = 11 : i64} {
  func.func @mlp_block_kernel(%arg0: i32, %arg1: memref<16x32xf32, #tpu.memory_space<vmem>>, %arg2: memref<32x256xf32, #tpu.memory_space<vmem>>, %arg3: memref<2x256xf32, #tpu.memory_space<vmem>>, %arg4: memref<16x256xf32, #tpu.memory_space<vmem>>) attributes {dimension_semantics = [#tpu.dimension_semantics<parallel>], iteration_bounds = array<i64: 1>, scalar_prefetch = 0 : i64, scratch_operands = 0 : i64, tpu.core_type = #tpu.core_type<tc>, window_params = [{pipeline_mode = #tpu.pipeline_mode<synchronous>, transform_indices = @transform_0, window_bounds = array<i64: 16, 32>}, {transform_indices = @transform_1, window_bounds = array<i64: 32, 256>}, {transform_indices = @transform_2, window_bounds = array<i64: 2, 256>}, {transform_indices = @transform_3, window_bounds = array<i64: 16, 256>}]} {
    %c0 = arith.constant 0 : index
    %c0_0 = arith.constant 0 : index
    %0 = vector.load %arg1[%c0, %c0_0] : memref<16x32xf32, #tpu.memory_space<vmem>>, vector<16x32xf32>
    %1 = arith.truncf %0 : vector<16x32xf32> to vector<16x32xbf16>
    %c0_1 = arith.constant 0 : index
    %c0_2 = arith.constant 0 : index
    %2 = vector.load %arg2[%c0_1, %c0_2] : memref<32x256xf32, #tpu.memory_space<vmem>>, vector<32x256xf32>
    %3 = arith.truncf %2 : vector<32x256xf32> to vector<32x256xbf16>
    %cst = arith.constant dense<0.000000e+00> : vector<16x256xf32>
    %4 = tpu.matmul %1, %3, %cst {dimension_numbers = #tpu.dot_dimension_numbers<[1], [0], [0], [1], [0, 0, 1, 1], [], []>} : vector<16x32xbf16>, vector<32x256xbf16>, vector<16x256xf32> -> vector<16x256xf32>
    %cst_3 = arith.constant dense<0.000000e+00> : vector<256xf32>
    %5 = vector.multi_reduction <add>, %4, %cst_3 [0] : vector<16x256xf32> to vector<256xf32>
    %6 = vector.shape_cast %5 : vector<256xf32> to vector<1x256xf32>
    %cst_4 = arith.constant 6.250000e-02 : f32
    %7 = vector.broadcast %cst_4 : f32 to vector<1x256xf32>
    %8 = arith.mulf %6, %7 : vector<1x256xf32>
    %9 = vector.broadcast %8 : vector<1x256xf32> to vector<16x256xf32>
    %10 = arith.subf %4, %9 : vector<16x256xf32>
    %11 = arith.mulf %10, %10 : vector<16x256xf32>
    %cst_5 = arith.constant dense<0.000000e+00> : vector<256xf32>
    %12 = vector.multi_reduction <add>, %11, %cst_5 [0] : vector<16x256xf32> to vector<256xf32>
    %13 = vector.shape_cast %12 : vector<256xf32> to vector<1x256xf32>
    %cst_6 = arith.constant 6.250000e-02 : f32
    %14 = vector.broadcast %cst_6 : f32 to vector<1x256xf32>
    %15 = arith.mulf %13, %14 : vector<1x256xf32>
    %cst_7 = arith.constant 9.99999974E-6 : f32
    %16 = vector.broadcast %cst_7 : f32 to vector<1x256xf32>
    %17 = arith.addf %15, %16 : vector<1x256xf32>
    %18 = math.rsqrt %17 : vector<1x256xf32>
    %c0_8 = arith.constant 0 : index
    %c0_9 = arith.constant 0 : index
    %19 = vector.load %arg3[%c0_8, %c0_9] : memref<2x256xf32, #tpu.memory_space<vmem>>, vector<1x256xf32>
    %c1 = arith.constant 1 : index
    %c0_10 = arith.constant 0 : index
    %20 = vector.load %arg3[%c1, %c0_10] : memref<2x256xf32, #tpu.memory_space<vmem>>, vector<1x256xf32>
    %21 = arith.mulf %19, %18 : vector<1x256xf32>
    %22 = vector.broadcast %21 : vector<1x256xf32> to vector<16x256xf32>
    %23 = arith.mulf %10, %22 : vector<16x256xf32>
    %24 = vector.broadcast %20 : vector<1x256xf32> to vector<16x256xf32>
    %25 = arith.addf %23, %24 : vector<16x256xf32>
    %cst_11 = arith.constant 0.000000e+00 : f32
    %26 = vector.broadcast %cst_11 : f32 to vector<16x256xf32>
    %27 = arith.maximumf %25, %26 : vector<16x256xf32>
    %c0_12 = arith.constant 0 : index
    %c0_13 = arith.constant 0 : index
    %28 = vector.load %arg4[%c0_12, %c0_13] : memref<16x256xf32, #tpu.memory_space<vmem>>, vector<16x256xf32>
    tpu.vector_store %arg4[%c0_12, %c0_13], %27 {strides = array<i32>} : memref<16x256xf32, #tpu.memory_space<vmem>>, vector<16x256xf32>,
    return
  }
  func.func @transform_0(%arg0: i32) -> (i32, i32) {
    %c0_i32 = arith.constant 0 : i32
    %c0_i32_0 = arith.constant 0 : i32
    %c0_i32_1 = arith.constant 0 : i32
    return %c0_i32, %c0_i32_0 : i32, i32
  }
  func.func @transform_1(%arg0: i32) -> (i32, i32) {
    %c0_i32 = arith.constant 0 : i32
    %c0_i32_0 = arith.constant 0 : i32
    return %c0_i32, %arg0 : i32, i32
  }
  func.func @transform_2(%arg0: i32) -> (i32, i32) {
    %c0_i32 = arith.constant 0 : i32
    %c0_i32_0 = arith.constant 0 : i32
    return %c0_i32, %arg0 : i32, i32
  }
  func.func @transform_3(%arg0: i32) -> (i32, i32) {
    %c0_i32 = arith.constant 0 : i32
    %c0_i32_0 = arith.constant 0 : i32
    return %c0_i32, %arg0 : i32, i32
  }
}

</mosaic_0001>

<llo_original>
// kernel: tpu_custom_call.1
$region0: #{tpu_custom_call.1}
  #allocation0 [shape = 'u32[]', space=smem, size = 0x4, offset = 0x4, fixed_abs, tag = 'smem constant byte address 0x4 - core index']
  #allocation1 [shape = 'u32[72,128]{1,0:T(1,128)}', space=vmem, size = 0x9000, scoped, tag = 'internal scratch']
  %s0 = inlined_call_operand.hbm [shape: f32[16,32], index: 0, kind: input, shape index: {}]
  %s1 = inlined_call_operand.hbm [shape: f32[32,256], index: 1, kind: input, shape index: {}]
  %s2 = inlined_call_operand.hbm [shape: f32[2,256], index: 2, kind: input, shape index: {}]
  %s3 = inlined_call_operand.hbm [shape: f32[16,256], index: 3, kind: output, shape index: {}]
  %s4 = sld [smem:[#allocation0]]
  $region34: #{tpu_custom_call.1} parent=0
    _
  %s6 = ssub.s32 1, %s4
  %s7 = scalar_select 0, %s6, %s4
  $region1: #{tpu_custom_call.1} parent=0
    #allocation2 [shape = 'u8[8192]{0}', space=vmem, size = 0x2000, scoped, tag = 'input window, operand 0, single buffered']
    #allocation3 [shape = 's32[1]{0}', space=sflag, size = 0x4, scoped, tag = 'scoped memory for tpu_custom_call.1']
    #allocation4 [shape = 's32[1]{0}', space=sflag, size = 0x4, scoped, tag = 'scoped memory for tpu_custom_call.1']
    #allocation5 [shape = 'u8[32768]{0}', space=vmem, size = 0x8000, scoped, tag = 'input window, operand 1, single buffered']
    #allocation6 [shape = 's32[1]{0}', space=sflag, size = 0x4, scoped, tag = 'scoped memory for tpu_custom_call.1']
    #allocation7 [shape = 'u8[2048]{0}', space=vmem, size = 0x800, scoped, tag = 'input window, operand 2, single buffered']
    #allocation8 [shape = 'u8[16384]{0}', space=vmem, size = 0x4000, scoped, tag = 'output window, operand 0, single buffered']
    %8 = vsyncpa [#allocation3], 0
    %9 = vsyncpa [#allocation6], 0
    %10 = vsyncpa [#allocation4], 0
    // Predicated region
    $region2: #{tpu_custom_call.1} parent=1 // pred_check
      _
    $region3: #{tpu_custom_call.1} parent=1 // pred_check_branch
      %12 = sbr.rel (0) target = $region5
    $region4: #{tpu_custom_call.1} parent=1 // pred_region
      %14 = vsyncadd [#allocation3], 0
      %s15 = sshll.u32 %s0, 4
      %s16 = int_to_ptr.hbm [resolvable:$true] %s15
      %s17 = sshll.u32 [#allocation2], 4
      %s18 = int_to_ptr.vmem [resolvable:$true] %s17
      %23 = dma.hbm_to_vmem [thread:$0]  %s16, 256, %s18, [#allocation3], 128, 128, 8
    $region5: #{tpu_custom_call.1} parent=1 // pred_fallthru
      _
    // Predicated region
    $region6: #{tpu_custom_call.1} parent=1 // pred_check
      _
    $region7: #{tpu_custom_call.1} parent=1 // pred_check_branch
      %25 = sbr.rel (0) target = $region9
    $region8: #{tpu_custom_call.1} parent=1 // pred_region
      %27 = vsyncadd [#allocation6], 0
      %s28 = sshll.u32 %s1, 4
      %s29 = int_to_ptr.hbm [resolvable:$true] %s28
      %s30 = sshll.u32 [#allocation5], 4
      %s31 = int_to_ptr.vmem [resolvable:$true] %s30
      %36 = dma.hbm_to_vmem [thread:$0]  %s29, 1024, %s31, [#allocation6], 256, 256, 16
    $region9: #{tpu_custom_call.1} parent=1 // pred_fallthru
      _
    // Predicated region
    $region10: #{tpu_custom_call.1} parent=1 // pred_check
      _
    $region11: #{tpu_custom_call.1} parent=1 // pred_check_branch
      %38 = sbr.rel (0) target = $region13
    $region12: #{tpu_custom_call.1} parent=1 // pred_region
      %40 = vsyncadd [#allocation6], 0
      %s42 = sshll.u32 %s2, 4
      %s43 = int_to_ptr.hbm [resolvable:$true] %s42
      %s44 = sshll.u32 [#allocation7], 4
      %s45 = int_to_ptr.vmem [resolvable:$true] %s44
      %47 = dma.hbm_to_vmem [thread:$0]  %s43, 64, %s45, [#allocation6]
    $region13: #{tpu_custom_call.1} parent=1 // pred_fallthru
      _
    // Predicated region
    $region14: #{tpu_custom_call.1} parent=1 // pred_check
      _
    $region15: #{tpu_custom_call.1} parent=1 // pred_check_branch
      %49 = sbr.rel (0) target = $region17
    $region16: #{tpu_custom_call.1} parent=1 // pred_region
      %51 = dma.done [#allocation3], 256
    $region17: #{tpu_custom_call.1} parent=1 // pred_fallthru
      _
    // Predicated region
    $region18: #{tpu_custom_call.1} parent=1 // pred_check
      _
    $region19: #{tpu_custom_call.1} parent=1 // pred_check_branch
      %53 = sbr.rel (0) target = $region21
    $region20: #{tpu_custom_call.1} parent=1 // pred_region
      %55 = dma.done [#allocation6], 1024
    $region21: #{tpu_custom_call.1} parent=1 // pred_fallthru
      _
    // Predicated region
    $region22: #{tpu_custom_call.1} parent=1 // pred_check
      _
    $region23: #{tpu_custom_call.1} parent=1 // pred_check_branch
      %57 = sbr.rel (0) target = $region25
    $region24: #{tpu_custom_call.1} parent=1 // pred_region
      %59 = dma.done [#allocation6], 64
    $region25: #{tpu_custom_call.1} parent=1 // pred_fallthru
      _
    %v61 = vld [vmem:[#allocation2] sm:$0xff]
    %v62 = vld [vmem:[#allocation2 + $0x8] sm:$0xff]
    %v63 = vpack.c.bf16 %v62, %v61
    %v64 = vld [vmem:[#allocation5] sm:$0xff]
    %v65 = vld [vmem:[#allocation5 + $0x8] sm:$0xff]
    %v66 = vld [vmem:[#allocation5 + $0x10] sm:$0xff]
    %v67 = vld [vmem:[#allocation5 + $0x18] sm:$0xff]
    %v68 = vld [vmem:[#allocation5 + $0x20] sm:$0xff]
    %v69 = vld [vmem:[#allocation5 + $0x28] sm:$0xff]
    %v70 = vld [vmem:[#allocation5 + $0x30] sm:$0xff]
    %v71 = vld [vmem:[#allocation5 + $0x38] sm:$0xff]
    %v72 = vpack.c.bf16 %v66, %v64
    %v73 = vpack.c.bf16 %v67, %v65
    %v74 = vpack.c.bf16 %v70, %v68
    %v75 = vpack.c.bf16 %v71, %v69
    %vm76 = vcmask 261120
    %v78 = vsel %vm76, %v63, 0
    %80 = vmatpush.bf16.msra.mxu0 0
    %81 = vmatpush.bf16.msra.mxu0 0
    %82 = vmatpush.bf16.msra.mxu0 0
    %83 = vmatpush.bf16.msra.mxu0 0
    %84 = vmatpush.bf16.msra.mxu0 0
    %85 = vmatpush.bf16.msra.mxu0 0
    %86 = vmatpush.bf16.msra.mxu0 %v74
    %87 = vmatpush.bf16.msra.mxu0 %v72
    %88 = vmatmul.bf16.gmra.mxu0 %v78
    %v89 = vpop.f32.mrf.mxu0
    %v90 = vadd.f32 0.0, %v89
    %v91 = vpop.f32.mrf.mxu0
    %v92 = vadd.f32 0.0, %v91
    %93 = vdwg.mxu0
    %94 = vmatpush.bf16.msra.mxu0 0
    %95 = vmatpush.bf16.msra.mxu0 0
    %96 = vmatpush.bf16.msra.mxu0 0
    %97 = vmatpush.bf16.msra.mxu0 0
    %98 = vmatpush.bf16.msra.mxu0 0
    %99 = vmatpush.bf16.msra.mxu0 0
    %100 = vmatpush.bf16.msra.mxu0 %v75
    %101 = vmatpush.bf16.msra.mxu0 %v73
    %102 = vmatmul.bf16.gmra.mxu0 %v78
    %v103 = vpop.f32.mrf.mxu0
    %v104 = vadd.f32 0.0, %v103
    %v105 = vpop.f32.mrf.mxu0
    %v106 = vadd.f32 0.0, %v105
    %107 = vdwg.mxu0
    %v108 = vadd.f32 %v90, %v92
    %v109 = vrot.slane %v108, 4
    %v110 = vadd.f32 %v108, %v109
    %v111 = vrot.slane %v110, 2
    %v112 = vadd.f32 %v110, %v111
    %v113 = vrot.slane %v112, 1
    %v114 = vadd.f32 %v112, %v113
    %v115 = vadd.f32 %v104, %v106
    %v116 = vrot.slane %v115, 4
    %v117 = vadd.f32 %v115, %v116
    %v118 = vrot.slane %v117, 2
    %v119 = vadd.f32 %v117, %v118
    %v120 = vrot.slane %v119, 1
    %v121 = vadd.f32 %v119, %v120
    %v122 = vmul.f32 %v114, 0.0625
    %v123 = vmul.f32 %v121, 0.0625
    %v124 = vsub.f32 %v90, %v122
    %v125 = vsub.f32 %v104, %v123
    %v126 = vsub.f32 %v92, %v122
    %v127 = vsub.f32 %v106, %v123
    %v128 = vmul.f32 %v124, %v124
    %v129 = vmul.f32 %v125, %v125
    %v130 = vmul.f32 %v126, %v126
    %v131 = vmul.f32 %v127, %v127
    %v132 = vadd.f32 %v128, %v130
    %v133 = vrot.slane %v132, 4
    %v134 = vadd.f32 %v132, %v133
    %v135 = vrot.slane %v134, 2
    %v136 = vadd.f32 %v134, %v135
    %v137 = vrot.slane %v136, 1
    %v138 = vadd.f32 %v136, %v137
    %v139 = vadd.f32 %v129, %v131
    %v140 = vrot.slane %v139, 4
    %v141 = vadd.f32 %v139, %v140
    %v142 = vrot.slane %v141, 2
    %v143 = vadd.f32 %v141, %v142
    %v144 = vrot.slane %v143, 1
    %v145 = vadd.f32 %v143, %v144
    %v146 = vmul.f32 %v138, 0.0625
    %v147 = vmul.f32 %v145, 0.0625
    %v148 = vadd.f32 %v146, 1e-05
    %v149 = vadd.f32 %v147, 1e-05
    %v150 = vrsqrt.pop %v148
    %v151 = vmul.f32 %v150, %v148
    %v152 = vmul.f32 %v151, %v150
    %v153 = vmul.f32 0.5, %v152
    %v154 = vsub.f32 1.5, %v153
    %v155 = vmul.f32 %v150, %v154
    %vm156 = vweird.f32 %v148
    %vm157 = vweird.f32 %v150
    %vm158 = vmor %vm156, %vm157
    %v159 = vsel %vm158, %v150, %v155
    %v160 = vrsqrt.pop %v149
    %v161 = vmul.f32 %v160, %v149
    %v162 = vmul.f32 %v161, %v160
    %v163 = vmul.f32 0.5, %v162
    %v164 = vsub.f32 1.5, %v163
    %v165 = vmul.f32 %v160, %v164
    %vm166 = vweird.f32 %v149
    %vm167 = vweird.f32 %v160
    %vm168 = vmor %vm166, %vm167
    %v169 = vsel %vm168, %v160, %v165
    %v170 = vld [vmem:[#allocation7] ss:$2 sm:$0x3]
    %s171 = scalar_lea.vmem [#allocation7], 1
    %v172 = vld [vmem:[%s171] ss:$2 sm:$0x3]
    %v175 = vrot.slane %v169, 7
    %vm176 = vcmask 1040384
    %v177 = vsel %vm176, %v159, %v175
    %v179 = vmul.f32 %v170, %v177
    %v181 = vperm.slane %v179, 0
    %v182 = vperm.slane %v179, 1
    %v185 = vmul.f32 %v124, %v181
    %v186 = vmul.f32 %v125, %v182
    %v187 = vmul.f32 %v126, %v181
    %v188 = vmul.f32 %v127, %v182
    %v190 = vperm.slane %v172, 0
    %v191 = vperm.slane %v172, 1
    %v194 = vadd.f32 %v185, %v190
    %v195 = vadd.f32 %v186, %v191
    %v196 = vadd.f32 %v187, %v190
    %v197 = vadd.f32 %v188, %v191
    %v198 = vmax.f32 %v194, 0.0
    %v199 = vmax.f32 %v195, 0.0
    %v200 = vmax.f32 %v196, 0.0
    %v201 = vmax.f32 %v197, 0.0
    %202 = vst [vmem:[#allocation8] sm:$0xff] %v198
    %203 = vst [vmem:[#allocation8 + $0x8] sm:$0xff] %v199
    %204 = vst [vmem:[#allocation8 + $0x10] sm:$0xff] %v200
    %205 = vst [vmem:[#allocation8 + $0x18] sm:$0xff] %v201
    // Predicated region
    $region26: #{tpu_custom_call.1} parent=1 // pred_check
      _
    $region27: #{tpu_custom_call.1} parent=1 // pred_check_branch
      %207 = sbr.rel (0) target = $region29
    $region28: #{tpu_custom_call.1} parent=1 // pred_region
      %209 = vsyncadd [#allocation4], 0
      %s210 = sshll.u32 [#allocation8], 4
      %s211 = int_to_ptr.vmem [resolvable:$true] %s210
      %s212 = sshll.u32 %s3, 4
      %s213 = int_to_ptr.hbm [resolvable:$true] %s212
      %218 = dma.vmem_to_hbm [thread:$0]  %s211, 512, %s213, [#allocation4], 256, 256, 16
    $region29: #{tpu_custom_call.1} parent=1 // pred_fallthru
      _
    // Predicated region
    $region30: #{tpu_custom_call.1} parent=1 // pred_check
      _
    $region31: #{tpu_custom_call.1} parent=1 // pred_check_branch
      %220 = sbr.rel (0) target = $region33
    $region32: #{tpu_custom_call.1} parent=1 // pred_region
      %222 = dma.done [#allocation4], 512
    $region33: #{tpu_custom_call.1} parent=1 // pred_fallthru
      _
    %223 = vsyncpa [#allocation3], 1
    %224 = vsyncpa [#allocation6], 1
    %225 = vsyncpa [#allocation4], 1

</llo_original>
